<compile_context>
chip_gen: v5e
topology: v5e:2x2
jax: 0.10.0
libtpu: 0.0.40
codegen_flags: <defaults>
</compile_context>

<pallas_src>
import functools

import jax
import jax.numpy as jnp
from jax import lax
from jax.experimental import pallas as pl
from jax.experimental.pallas import tpu as pltpu

EPS = 1e-12  # F.normalize default eps


def _round_up(x, m):
    return (x + m - 1) // m * m


def _vmem_budget_and_limit():
    """Per-chip scoped-VMEM limit and the (smaller) tile-planning budget."""
    cap = 0
    try:
        cap = int(getattr(pltpu.get_tpu_info(), "vmem_capacity_bytes", 0) or 0)
    except Exception:
        cap = 0
    if cap <= 0:
        cap = 64 * 1024 * 1024            # conservative default (v7x physical)
    # 48 MiB scoped on v7x (64 MiB phys), 96 MiB on v5e/v6e (128 MiB phys).
    limit = min((cap * 3) // 4, 100 * 1024 * 1024)
    budget = (limit * 4) // 5             # plan tiles against ~80% of the limit
    return budget, limit


# --------------------------- kernels ---------------------------------------


def _colnorm_kernel(w_ref, wn_ref):
    # Normalize weight columns (dim=0) of one C-tile; full (padded) F resident.
    w = w_ref[...].astype(jnp.float32)                  # [Fp, tc]
    sumsq = jnp.sum(w * w, axis=0, keepdims=True)       # [1, tc]
    # max(sqrt(s), EPS) == sqrt(max(s, EPS^2)); rsqrt runs on the EUP.
    inv = lax.rsqrt(jnp.maximum(sumsq, EPS * EPS))
    wn_ref[...] = (w * inv).astype(wn_ref.dtype)


def _rownorm_pad_kernel(x_ref, xn_ref):
    # Row-normalize one M-tile of x (dim=1) in f32, cast to bf16 and write a
    # zero-padded (tm, Fp) slab.  Folds x's F-padding into the kernel so the
    # wrapper never does a jnp.pad round trip through HBM.
    f = x_ref.shape[-1]
    fp = xn_ref.shape[-1]
    x = x_ref[...].astype(jnp.float32)                  # [tm, F]
    sumsq = jnp.sum(x * x, axis=1, keepdims=True)       # [tm, 1]
    inv = lax.rsqrt(jnp.maximum(sumsq, EPS * EPS))      # EUP rsqrt
    xn = (x * inv).astype(xn_ref.dtype)
    if f == fp:
        xn_ref[...] = xn
    else:
        xn_ref[...] = jnp.zeros(xn_ref.shape, xn_ref.dtype)  # zero pad lanes
        xn_ref[:, :f] = xn                                    # masked partial store


def _matmul_kernel(xn_ref, wn_ref, o_ref):
    # Pure bf16 MXU matmul, f32 accumulation (full F resident per block).
    o_ref[...] = jnp.dot(
        xn_ref[...], wn_ref[...], preferred_element_type=jnp.float32
    ).astype(o_ref.dtype)


def _matmul_ktiled_kernel(xn_ref, wn_ref, o_ref, acc_ref):
    # K-tiled variant: f32 accumulator scratch, k innermost ("arbitrary").
    k = pl.program_id(2)

    @pl.when(k == 0)
    def _():
        acc_ref[...] = jnp.zeros_like(acc_ref)

    acc_ref[...] += jnp.dot(
        xn_ref[...], wn_ref[...], preferred_element_type=jnp.float32
    )

    @pl.when(k == pl.num_programs(2) - 1)
    def _():
        o_ref[...] = acc_ref[...].astype(o_ref.dtype)


# --------------------------- wrappers ---------------------------------------


@functools.partial(jax.jit, static_argnames=("compute_dtype",))
def prepare_normed_weight(weight, compute_dtype=jnp.bfloat16):
    """Column-normalize the (batch-static) weight once per weight update.

    Returns a zero-padded (Fp, Cp) bf16 MXU operand.  Cache it and pass it to
    normed_linear_fwd; recomputing it per forward wastes HBM traffic + a launch.
    """
    F, C = weight.shape
    Fp = _round_up(F, 128)
    Cp = _round_up(C, 128)
    _, vmem_limit = _vmem_budget_and_limit()

    w_p = jnp.pad(weight, ((0, Fp - F), (0, Cp - C)))   # one-time, off hot path

    tc = 512 if Cp % 512 == 0 else 256 if Cp % 256 == 0 else 128
    while tc > 128 and 2 * Fp * tc * (4 + 2) > vmem_limit:
        tc //= 2

    return pl.pallas_call(
        _colnorm_kernel,
        out_shape=jax.ShapeDtypeStruct((Fp, Cp), compute_dtype),
        grid=(Cp // tc,),
        in_specs=[pl.BlockSpec((Fp, tc), lambda j: (0, j))],
        out_specs=pl.BlockSpec((Fp, tc), lambda j: (0, j)),
        compiler_params=pltpu.CompilerParams(
            dimension_semantics=("parallel",),
            vmem_limit_bytes=vmem_limit,
        ),
        cost_estimate=pl.CostEstimate(
            flops=3 * Fp * Cp,
            transcendentals=Cp,
            bytes_accessed=Fp * Cp * (weight.dtype.itemsize + 2),
        ),
    )(w_p)


def _plan_tiles(N, Fp, Cp, out_itemsize, budget):
    """Pick (tm, tc, tk) against the VMEM budget.  tk == Fp means F-resident."""

    def pre_need(tm):
        # row-norm preamble: double-buffered f32 input + bf16 output blocks
        return 2 * tm * Fp * (4 + 2)

    def mm_need(tm, tc, tk):
        need = 2 * (tm * tk + tk * tc) * 2 + 2 * tm * tc * out_itemsize
        if tk < Fp:
            need += tm * tc * 4           # f32 accumulator scratch
        return need

    tm_cands, tm = [], min(256, _round_up(N, 8))
    while True:
        tm_cands.append(tm)
        if tm <= 8:
            break
        tm = max(8, _round_up(tm // 2, 8))

    for tm in tm_cands:
        if pre_need(tm) > budget:
            continue
        # (a) weight fully resident in VMEM: streamed from HBM exactly once.
        if mm_need(tm, Cp, Fp) <= budget:
            return tm, Cp, Fp
        # (b) C-tiled, full-F blocks.
        for tc in (512, 256, 128):
            if Cp % tc == 0 and mm_need(tm, tc, Fp) <= budget:
                return tm, tc, Fp
        # (c) K-tiled accumulator path: per-step VMEM independent of feat_dim
        #     (required under v7x's 64 MiB VMEM for large F).
        for tc in (512, 256, 128):
            if Cp % tc:
                continue
            for tk in (2048, 1024, 512, 256, 128):
                if Fp % tk == 0 and mm_need(tm, tc, tk) <= budget:
                    return tm, tc, tk
    return 8, 128, 128


@functools.partial(
    jax.jit, static_argnames=("num_classes", "out_dtype", "plan_override"))
def normed_linear_fwd(x, wn, *, num_classes, out_dtype=None, plan_override=None):
    """out[N, C] = normalize_rows(x[N, F]) @ wn, wn = prepare_normed_weight(w).

    plan_override: optional (tm, tc, tk, swap) for testing/tuning.  tk == Fp
    selects the F-resident kernel; smaller tk selects the K-tiled path.
    """
    N, F = x.shape
    Fp, Cp = wn.shape
    assert Fp >= F and Fp % 128 == 0 and Cp % 128 == 0 and Cp >= num_classes
    out_dtype = jnp.dtype(out_dtype) if out_dtype is not None else jnp.dtype(x.dtype)
    budget, vmem_limit = _vmem_budget_and_limit()

    # ---- tile / grid plan ---------------------------------------------------
    if plan_override is not None:
        tm, tc, tk, swap = plan_override
        assert tm % 8 == 0 and Cp % tc == 0 and Fp % tk == 0
    else:
        tm, tc, tk = _plan_tiles(N, Fp, Cp, out_dtype.itemsize, budget)
        swap = False
    Np = _round_up(N, tm)
    m_tiles, c_tiles, ktiled = Np // tm, Cp // tc, tk < Fp

    if plan_override is None:
        # v7x megacore: keep >= 2 "parallel" blocks when the batch is one tile.
        if m_tiles == 1 and c_tiles == 1 and Cp >= 256:
            tc = Cp // 2 if Cp % 256 == 0 else 128
            c_tiles = Cp // tc
        # Grid order: fetch the larger operand once, re-stream the smaller one.
        if not ktiled and m_tiles > 1 and c_tiles > 1:
            swap = (c_tiles * Np * Fp + Fp * Cp) < (Np * Fp + m_tiles * Fp * Cp)
    if ktiled:
        swap = False  # with k innermost, outer-axis order is traffic-neutral

    # ---- row-norm preamble (folds x's padding; emits the bf16 MXU operand) --
    xn = pl.pallas_call(
        _rownorm_pad_kernel,
        out_shape=jax.ShapeDtypeStruct((Np, Fp), wn.dtype),
        grid=(Np // tm,),
        in_specs=[pl.BlockSpec((tm, F), lambda i: (i, 0))],
        out_specs=pl.BlockSpec((tm, Fp), lambda i: (i, 0)),
        compiler_params=pltpu.CompilerParams(
            dimension_semantics=("parallel",),
            vmem_limit_bytes=vmem_limit,
        ),
        cost_estimate=pl.CostEstimate(
            flops=3 * N * F,
            transcendentals=N,
            bytes_accessed=N * F * x.dtype.itemsize + Np * Fp * 2,
        ),
    )(x)

    # ---- matmul -------------------------------------------------------------
    if ktiled:
        grid = (m_tiles, c_tiles, Fp // tk)
        x_map = lambda i, j, k: (i, k)
        w_map = lambda i, j, k: (k, j)
        o_map = lambda i, j, k: (i, j)
        sem = ("parallel", "parallel", "arbitrary")
        scratch = [pltpu.VMEM((tm, tc), jnp.float32)]
        kernel = _matmul_ktiled_kernel
        in_bytes = (c_tiles * Np * Fp + m_tiles * Fp * Cp) * 2
    else:
        kernel, scratch = _matmul_kernel, []
        sem = ("parallel", "parallel")
        if swap:      # weight streamed once, x re-streamed per C-tile
            grid = (c_tiles, m_tiles)
            x_map = lambda j, i: (i, 0)
            w_map = lambda j, i: (0, j)
            o_map = lambda j, i: (i, j)
            in_bytes = (c_tiles * Np * Fp + Fp * Cp) * 2
        else:         # x streamed once, weight re-streamed per M-tile
            grid = (m_tiles, c_tiles)
            x_map = lambda i, j: (i, 0)
            w_map = lambda i, j: (0, j)
            o_map = lambda i, j: (i, j)
            in_bytes = (Np * Fp + m_tiles * Fp * Cp) * 2

    out_p = pl.pallas_call(
        kernel,
        out_shape=jax.ShapeDtypeStruct((Np, Cp), out_dtype),
        grid=grid,
        in_specs=[pl.BlockSpec((tm, tk), x_map),
                  pl.BlockSpec((tk, tc), w_map)],
        out_specs=pl.BlockSpec((tm, tc), o_map),
        scratch_shapes=scratch,
        compiler_params=pltpu.CompilerParams(
            dimension_semantics=sem,
            vmem_limit_bytes=vmem_limit,
        ),
        cost_estimate=pl.CostEstimate(
            flops=2 * Np * Fp * Cp,
            transcendentals=0,
            bytes_accessed=in_bytes + Np * Cp * out_dtype.itemsize,
        ),
    )(xn, wn)

    return out_p[:N, :num_classes]


def normed_linear(x, weight, *, out_dtype=None, plan_override=None):
    """One-shot convenience.  For repeated forwards with the same weight, call
    prepare_normed_weight once and reuse it with normed_linear_fwd."""
    wn = prepare_normed_weight(weight)
    return normed_linear_fwd(x, wn, num_classes=weight.shape[1],
                             out_dtype=out_dtype, plan_override=plan_override)


# --------------------------- init + reference -------------------------------


def init_normed_linear_weight(key, feat_dim, num_classes):
    # torch: weight.uniform_(-1, 1).renorm_(2, 1, 1e-05).mul_(100000.0)
    w = jax.random.uniform(key, (feat_dim, num_classes), jnp.float32, -1.0, 1.0)
    col_norm = jnp.sqrt(jnp.sum(w * w, axis=0, keepdims=True))
    maxnorm = 1e-5
    scale = jnp.where(col_norm > maxnorm, maxnorm / (col_norm + 1e-7), 1.0)
    return w * scale * 1e5


def _reference(x, weight):
    xn = x / jnp.maximum(jnp.linalg.norm(x, axis=1, keepdims=True), EPS)
    wn = weight / jnp.maximum(jnp.linalg.norm(weight, axis=0, keepdims=True), EPS)
    return xn @ wn


if __name__ == "__main__":
    key = jax.random.PRNGKey(0)
    k_x, k_w, k_x2, k_w2 = jax.random.split(key, 4)

    # Small shapes matching the module's forward: x[N, feat_dim] @ w[feat_dim, C].
    batch, feat_dim, num_classes = 8, 32, 16
    x = jax.random.normal(k_x, (batch, feat_dim), jnp.float32)
    w = init_normed_linear_weight(k_w, feat_dim, num_classes)

    out = jax.block_until_ready(normed_linear(x, w))
    ref = _reference(x, w)
    assert out.shape == (batch, num_classes)
    # bf16 MXU operands -> relaxed tolerance (cosine values are in [-1, 1]).
    assert jnp.allclose(out, ref, atol=2e-2, rtol=2e-2), "small-shape mismatch"

    # Non-aligned shapes exercising padding + the C-tiled / K-tiled / swapped
    # paths; the weight is prepped ONCE and reused across all three calls.
    n2, f2, c2 = 200, 192, 300
    x2 = jax.random.normal(k_x2, (n2, f2), jnp.float32)
    w2 = init_normed_linear_weight(k_w2, f2, c2)
    wn2 = jax.block_until_ready(prepare_normed_weight(w2))
    ref2 = _reference(x2, w2)

    out2 = jax.block_until_ready(
        normed_linear_fwd(x2, wn2, num_classes=c2))
    assert out2.shape == (n2, c2)
    assert jnp.allclose(out2, ref2, atol=2e-2, rtol=2e-2), "tiled mismatch"

    # K-tiled accumulator path (tm=104, tc=128, tk=128 of Fp=256).
    out2k = jax.block_until_ready(
        normed_linear_fwd(x2, wn2, num_classes=c2,
                          plan_override=(104, 128, 128, False)))
    assert jnp.allclose(out2k, ref2, atol=2e-2, rtol=2e-2), "k-tiled mismatch"

    # Swapped grid order (weight fetched once, x re-streamed).
    out2s = jax.block_until_ready(
        normed_linear_fwd(x2, wn2, num_classes=c2,
                          plan_override=(104, 128, 256, True)))
    assert jnp.allclose(out2s, ref2, atol=2e-2, rtol=2e-2), "swapped mismatch"

    print("KERNEL_OK")
</pallas_src>

<mosaic_0001>
module attributes {stable_mosaic.version = 11 : i64} {
  func.func @_colnorm_kernel(%arg0: i32, %arg1: memref<128x128xf32, #tpu.memory_space<vmem>>, %arg2: memref<128x128xbf16, #tpu.memory_space<vmem>>) attributes {dimension_semantics = [#tpu.dimension_semantics<parallel>], iteration_bounds = array<i64: 1>, scalar_prefetch = 0 : i64, scratch_operands = 0 : i64, tpu.core_type = #tpu.core_type<tc>, window_params = [{transform_indices = @transform_0, window_bounds = array<i64: 128, 128>}, {transform_indices = @transform_1, window_bounds = array<i64: 128, 128>}]} {
    %c0 = arith.constant 0 : index
    %c0_0 = arith.constant 0 : index
    %0 = vector.load %arg1[%c0, %c0_0] : memref<128x128xf32, #tpu.memory_space<vmem>>, vector<128x128xf32>
    %1 = arith.mulf %0, %0 : vector<128x128xf32>
    %cst = arith.constant dense<0.000000e+00> : vector<128xf32>
    %2 = vector.multi_reduction <add>, %1, %cst [0] : vector<128x128xf32> to vector<128xf32>
    %3 = vector.shape_cast %2 : vector<128xf32> to vector<1x128xf32>
    %cst_1 = arith.constant 1.000000e-24 : f32
    %4 = vector.broadcast %cst_1 : f32 to vector<1x128xf32>
    %5 = arith.maximumf %3, %4 : vector<1x128xf32>
    %6 = math.rsqrt %5 : vector<1x128xf32>
    %7 = vector.broadcast %6 : vector<1x128xf32> to vector<128x128xf32>
    %8 = arith.mulf %0, %7 : vector<128x128xf32>
    %9 = arith.truncf %8 : vector<128x128xf32> to vector<128x128xbf16>
    %c0_2 = arith.constant 0 : index
    %c0_3 = arith.constant 0 : index
    %10 = vector.load %arg2[%c0_2, %c0_3] : memref<128x128xbf16, #tpu.memory_space<vmem>>, vector<128x128xbf16>
    tpu.vector_store %arg2[%c0_2, %c0_3], %9 {strides = array<i32>} : memref<128x128xbf16, #tpu.memory_space<vmem>>, vector<128x128xbf16>,
    return
  }
  func.func @transform_0(%arg0: i32) -> (i32, i32) {
    %c0_i32 = arith.constant 0 : i32
    %c0_i32_0 = arith.constant 0 : i32
    return %c0_i32, %arg0 : i32, i32
  }
  func.func @transform_1(%arg0: i32) -> (i32, i32) {
    %c0_i32 = arith.constant 0 : i32
    %c0_i32_0 = arith.constant 0 : i32
    return %c0_i32, %arg0 : i32, i32
  }
}

</mosaic_0001>

<llo_original>
// kernel: prepare_normed_weight.1
$region0: #{prepare_normed_weight.1}
  #allocation0 [shape = 'u32[]', space=smem, size = 0x4, offset = 0x4, fixed_abs, tag = 'smem constant byte address 0x4 - core index']
  #allocation1 [shape = 'u32[72,128]{1,0:T(1,128)}', space=vmem, size = 0x9000, scoped, tag = 'internal scratch']
  %s0 = inlined_call_operand.vmem [shape: f32[128,128], index: 0, kind: input, shape index: {}]
  %s1 = inlined_call_operand.hbm [shape: bf16[128,128], index: 1, kind: output, shape index: {}]
  %s2 = sld [smem:[#allocation0]]
  $region14: #{prepare_normed_weight.1} parent=0
    _
  %s4 = ssub.s32 1, %s2
  %s5 = scalar_select 0, %s4, %s2
  $region1: #{prepare_normed_weight.1} parent=0
    #allocation2 [shape = 'u8[32768]{0}', space=vmem, size = 0x8000, scoped, tag = 'output window, operand 0, single buffered']
    #allocation3 [shape = 's32[1]{0}', space=sflag, size = 0x4, scoped, tag = 'scoped memory for prepare_normed_weight.1']
    %6 = vsyncpa [#allocation3], 0
    // Predicated region
    $region2: #{prepare_normed_weight.1} parent=1 // pred_check
      _
    $region3: #{prepare_normed_weight.1} parent=1 // pred_check_branch
      %8 = sbr.rel (0) target = $region5
    $region4: #{prepare_normed_weight.1} parent=1 // pred_region
      _
    $region5: #{prepare_normed_weight.1} parent=1 // pred_fallthru
      _
    %v9 = vld [vmem:[%s0] sm:$0xff]
    %v10 = vld [vmem:[%s0 + $0x8] sm:$0xff]
    %v11 = vld [vmem:[%s0 + $0x10] sm:$0xff]
    %v12 = vld [vmem:[%s0 + $0x18] sm:$0xff]
    %v13 = vld [vmem:[%s0 + $0x20] sm:$0xff]
    %v14 = vld [vmem:[%s0 + $0x28] sm:$0xff]
    %v15 = vld [vmem:[%s0 + $0x30] sm:$0xff]
    %v16 = vld [vmem:[%s0 + $0x38] sm:$0xff]
    %v17 = vld [vmem:[%s0 + $0x40] sm:$0xff]
    %v18 = vld [vmem:[%s0 + $0x48] sm:$0xff]
    %v19 = vld [vmem:[%s0 + $0x50] sm:$0xff]
    %v20 = vld [vmem:[%s0 + $0x58] sm:$0xff]
    %v21 = vld [vmem:[%s0 + $0x60] sm:$0xff]
    %v22 = vld [vmem:[%s0 + $0x68] sm:$0xff]
    %v23 = vld [vmem:[%s0 + $0x70] sm:$0xff]
    %v24 = vld [vmem:[%s0 + $0x78] sm:$0xff]
    %v25 = vmul.f32 %v9, %v9
    %v26 = vmul.f32 %v10, %v10
    %v27 = vmul.f32 %v11, %v11
    %v28 = vmul.f32 %v12, %v12
    %v29 = vmul.f32 %v13, %v13
    %v30 = vmul.f32 %v14, %v14
    %v31 = vmul.f32 %v15, %v15
    %v32 = vmul.f32 %v16, %v16
    %v33 = vmul.f32 %v17, %v17
    %v34 = vmul.f32 %v18, %v18
    %v35 = vmul.f32 %v19, %v19
    %v36 = vmul.f32 %v20, %v20
    %v37 = vmul.f32 %v21, %v21
    %v38 = vmul.f32 %v22, %v22
    %v39 = vmul.f32 %v23, %v23
    %v40 = vmul.f32 %v24, %v24
    %v41 = vadd.f32 %v25, %v26
    %v42 = vadd.f32 %v41, %v27
    %v43 = vadd.f32 %v42, %v28
    %v44 = vadd.f32 %v43, %v29
    %v45 = vadd.f32 %v44, %v30
    %v46 = vadd.f32 %v45, %v31
    %v47 = vadd.f32 %v46, %v32
    %v48 = vadd.f32 %v47, %v33
    %v49 = vadd.f32 %v48, %v34
    %v50 = vadd.f32 %v49, %v35
    %v51 = vadd.f32 %v50, %v36
    %v52 = vadd.f32 %v51, %v37
    %v53 = vadd.f32 %v52, %v38
    %v54 = vadd.f32 %v53, %v39
    %v55 = vadd.f32 %v54, %v40
    %v56 = vrot.slane %v55, 4
    %v57 = vadd.f32 %v55, %v56
    %v58 = vrot.slane %v57, 2
    %v59 = vadd.f32 %v57, %v58
    %v60 = vrot.slane %v59, 1
    %v61 = vadd.f32 %v59, %v60
    %v62 = vmax.f32 %v61, 1e-24
    %v63 = vrsqrt.pop %v62
    %v64 = vmul.f32 %v63, %v62
    %v65 = vmul.f32 %v64, %v63
    %v66 = vmul.f32 0.5, %v65
    %v67 = vsub.f32 1.5, %v66
    %v68 = vmul.f32 %v63, %v67
    %vm69 = vweird.f32 %v62
    %vm70 = vweird.f32 %v63
    %vm71 = vmor %vm69, %vm70
    %v72 = vsel %vm71, %v63, %v68
    %v73 = vmul.f32 %v9, %v72
    %v74 = vmul.f32 %v10, %v72
    %v75 = vmul.f32 %v11, %v72
    %v76 = vmul.f32 %v12, %v72
    %v77 = vmul.f32 %v13, %v72
    %v78 = vmul.f32 %v14, %v72
    %v79 = vmul.f32 %v15, %v72
    %v80 = vmul.f32 %v16, %v72
    %v81 = vmul.f32 %v17, %v72
    %v82 = vmul.f32 %v18, %v72
    %v83 = vmul.f32 %v19, %v72
    %v84 = vmul.f32 %v20, %v72
    %v85 = vmul.f32 %v21, %v72
    %v86 = vmul.f32 %v22, %v72
    %v87 = vmul.f32 %v23, %v72
    %v88 = vmul.f32 %v24, %v72
    %v89 = vpack.c.bf16 %v73, %v73
    %v90 = vpack.c.bf16 %v74, %v74
    %v91 = vpack.c.bf16 %v75, %v75
    %v92 = vpack.c.bf16 %v76, %v76
    %v93 = vpack.c.bf16 %v77, %v77
    %v94 = vpack.c.bf16 %v78, %v78
    %v95 = vpack.c.bf16 %v79, %v79
    %v96 = vpack.c.bf16 %v80, %v80
    %v97 = vpack.c.bf16 %v81, %v81
    %v98 = vpack.c.bf16 %v82, %v82
    %v99 = vpack.c.bf16 %v83, %v83
    %v100 = vpack.c.bf16 %v84, %v84
    %v101 = vpack.c.bf16 %v85, %v85
    %v102 = vpack.c.bf16 %v86, %v86
    %v103 = vpack.c.bf16 %v87, %v87
    %v104 = vpack.c.bf16 %v88, %v88
    %105 = vst [vmem:[#allocation2] sm:$0xf] %v89
    %106 = vst [vmem:[#allocation2 + $0x4] sm:$0xf] %v90
    %107 = vst [vmem:[#allocation2 + $0x8] sm:$0xf] %v91
    %108 = vst [vmem:[#allocation2 + $0xc] sm:$0xf] %v92
    %109 = vst [vmem:[#allocation2 + $0x10] sm:$0xf] %v93
    %110 = vst [vmem:[#allocation2 + $0x14] sm:$0xf] %v94
    %111 = vst [vmem:[#allocation2 + $0x18] sm:$0xf] %v95
    %112 = vst [vmem:[#allocation2 + $0x1c] sm:$0xf] %v96
    %113 = vst [vmem:[#allocation2 + $0x20] sm:$0xf] %v97
    %114 = vst [vmem:[#allocation2 + $0x24] sm:$0xf] %v98
    %115 = vst [vmem:[#allocation2 + $0x28] sm:$0xf] %v99
    %116 = vst [vmem:[#allocation2 + $0x2c] sm:$0xf] %v100
    %117 = vst [vmem:[#allocation2 + $0x30] sm:$0xf] %v101
    %118 = vst [vmem:[#allocation2 + $0x34] sm:$0xf] %v102
    %119 = vst [vmem:[#allocation2 + $0x38] sm:$0xf] %v103
    %120 = vst [vmem:[#allocation2 + $0x3c] sm:$0xf] %v104
    // Predicated region
    $region6: #{prepare_normed_weight.1} parent=1 // pred_check
      _
    $region7: #{prepare_normed_weight.1} parent=1 // pred_check_branch
      %122 = sbr.rel (0) target = $region9
    $region8: #{prepare_normed_weight.1} parent=1 // pred_region
      %124 = vsyncadd [#allocation3], 0
      %s125 = sshll.u32 [#allocation2], 4
      %s126 = int_to_ptr.vmem [resolvable:$true] %s125
      %s127 = sshll.u32 %s1, 4
      %s128 = int_to_ptr.hbm [resolvable:$true] %s127
      %133 = dma.vmem_to_hbm [thread:$0]  %s126, 1024, %s128, [#allocation3], 64, 64, 4
    $region9: #{prepare_normed_weight.1} parent=1 // pred_fallthru
      _
    // Predicated region
    $region10: #{prepare_normed_weight.1} parent=1 // pred_check
      _
    $region11: #{prepare_normed_weight.1} parent=1 // pred_check_branch
      %135 = sbr.rel (0) target = $region13
    $region12: #{prepare_normed_weight.1} parent=1 // pred_region
      %137 = dma.done [#allocation3], 1024
    $region13: #{prepare_normed_weight.1} parent=1 // pred_fallthru
      _
    %138 = vsyncpa [#allocation3], 1

</llo_original>
